<compile_context>
chip_gen: v7x
topology: tpu7x:2x2x1
jax: 0.10.0
libtpu: 0.0.40
codegen_flags: <defaults>
</compile_context>

<pallas_src>
import jax
import jax.numpy as jnp
from jax.experimental import pallas as pl
from jax.experimental.pallas import tpu as pltpu

_LANE = 128
_SUBLANE = 8


def _round_up(n, m):
    return ((n + m - 1) // m) * m


def mlp_kernel(x_ref, w1_ref, b1_ref, w2_ref, b2_ref, o_ref):
    # linear1: x @ W1 + b1  (MXU, f32 accumulation)
    h = jnp.dot(x_ref[...], w1_ref[...], preferred_element_type=jnp.float32)
    h = h + b1_ref[...]                  # b1 is (1, H_pad) -> broadcasts over rows
    # act_fn: tanh (EUP, f32)
    h = jnp.tanh(h)
    # linear2: h @ W2 + b2.  Cast to weight dtype on purpose: if the prepared
    # weights are bf16, the second matmul takes the bf16 MXU path while
    # accumulation / bias stay f32.
    out = jnp.dot(h.astype(w2_ref.dtype), w2_ref[...],
                  preferred_element_type=jnp.float32)
    out = out + b2_ref[...]              # b2 is (1, O_pad)
    o_ref[...] = out.astype(o_ref.dtype)


def prepare_params(w1, b1, w2, b2, *, dtype=None):
    """One-time param prep (hoisted out of the forward).

    Pads hidden/output feature dims to 128-lane multiples so the matmuls and
    the output store path are lane-dense.  Zero-padded hidden columns give
    tanh(0)=0 activations, which meet the zero-padded rows of w2, so the
    padded outputs are exact and the wrapper only slices columns.
    Weights are stored pre-transposed as [in_features, out_features]
    (nn.Linear stores [out, in] and does x @ W.T + b — semantics identical).
    """
    if dtype is not None:
        w1, b1, w2, b2 = (a.astype(dtype) for a in (w1, b1, w2, b2))
    K, H = w1.shape
    O = w2.shape[1]
    H_pad = _round_up(H, _LANE)
    O_pad = _round_up(O, _LANE)
    w1_p = jnp.pad(w1, ((0, 0), (0, H_pad - H)))
    b1_p = jnp.pad(b1, (0, H_pad - H)).reshape(1, H_pad)
    w2_p = jnp.pad(w2, ((0, H_pad - H), (0, O_pad - O)))
    b2_p = jnp.pad(b2, (0, O_pad - O)).reshape(1, O_pad)
    return (w1_p, b1_p, w2_p, b2_p, O)


def simple_classifier_forward(x, prepared, *, tile_b=512,
                              gridless_limit_bytes=12 << 20):
    """x: [B, K]; prepared: output of prepare_params()."""
    w1_p, b1_p, w2_p, b2_p, O = prepared
    B, K = x.shape
    H_pad = w1_p.shape[1]
    O_pad = w2_p.shape[1]

    out_dtype = x.dtype
    x_item = jnp.dtype(x.dtype).itemsize
    w_item = jnp.dtype(w1_p.dtype).itemsize
    weight_bytes = w_item * (K * H_pad + H_pad * O_pad + H_pad + O_pad)

    def cost(rows):
        return pl.CostEstimate(
            flops=int(2 * rows * (K * H_pad + H_pad * O_pad)),
            transcendentals=int(rows * H_pad),
            bytes_accessed=int(x_item * rows * (K + O_pad) + weight_bytes),
        )

    # -------- gridless path: whole arrays resident in VMEM, no pipeline -----
    gridless_vmem = (x_item * B * (K + O_pad)          # x + padded out
                     + 4 * B * (H_pad + O_pad)          # f32 intermediates
                     + weight_bytes)
    if gridless_vmem <= gridless_limit_bytes:
        out = pl.pallas_call(
            mlp_kernel,
            out_shape=jax.ShapeDtypeStruct((B, O_pad), out_dtype),
            in_specs=[pl.BlockSpec(memory_space=pltpu.MemorySpace.VMEM)] * 5,
            out_specs=pl.BlockSpec(memory_space=pltpu.MemorySpace.VMEM),
            compiler_params=pltpu.CompilerParams(
                vmem_limit_bytes=int(min(max(4 * gridless_vmem, 16 << 20),
                                         56 << 20))),
            cost_estimate=cost(B),
        )(x, w1_p, b1_p, w2_p, b2_p)
        return out[:, :O]

    # -------- batch-tiled grid path (no batch padding of x) -----------------
    # Pick the tile so the grid length is even -> the "parallel" batch axis is
    # split evenly across v7x's two TensorCores (no idle TC on an odd tail).
    n_tiles = pl.cdiv(B, tile_b)
    if n_tiles > 1 and n_tiles % 2 == 1:
        n_tiles += 1
    tile = max(_SUBLANE, _round_up(pl.cdiv(B, n_tiles), _SUBLANE))
    grid = (pl.cdiv(B, tile),)   # ragged last block handled by Pallas;
                                 # garbage rows never reach the (B, O_pad) output.

    tile_vmem = (2 * x_item * tile * (K + O_pad)        # double-buffered x/out tiles
                 + 2 * weight_bytes                     # resident weights (dbl-buffered)
                 + 4 * tile * (H_pad + O_pad))          # f32 intermediates
    vmem_limit = int(min(max(2 * tile_vmem, 16 << 20), 56 << 20))

    out = pl.pallas_call(
        mlp_kernel,
        out_shape=jax.ShapeDtypeStruct((B, O_pad), out_dtype),
        grid=grid,
        in_specs=[
            pl.BlockSpec((tile, K), lambda i: (i, 0)),       # streamed x tile
            pl.BlockSpec((K, H_pad), lambda i: (0, 0)),      # w1 resident
            pl.BlockSpec((1, H_pad), lambda i: (0, 0)),      # b1 resident
            pl.BlockSpec((H_pad, O_pad), lambda i: (0, 0)),  # w2 resident
            pl.BlockSpec((1, O_pad), lambda i: (0, 0)),      # b2 resident
        ],
        out_specs=pl.BlockSpec((tile, O_pad), lambda i: (i, 0)),
        compiler_params=pltpu.CompilerParams(
            dimension_semantics=("parallel",),               # megacore batch split
            vmem_limit_bytes=vmem_limit),
        cost_estimate=cost(B),
    )(x, w1_p, b1_p, w2_p, b2_p)
    return out[:, :O]


def init_params(key, num_inputs, num_hidden, num_outputs, dtype=jnp.float32):
    """Deterministic init mimicking nn.Linear's uniform(-1/sqrt(fan_in), +...)."""
    k1, k2, k3, k4 = jax.random.split(key, 4)
    bound1 = 1.0 / jnp.sqrt(num_inputs)
    bound2 = 1.0 / jnp.sqrt(num_hidden)
    # Stored as [in_features, out_features] (pre-transposed vs. PyTorch).
    w1 = jax.random.uniform(k1, (num_inputs, num_hidden), dtype, -bound1, bound1)
    b1 = jax.random.uniform(k2, (num_hidden,), dtype, -bound1, bound1)
    w2 = jax.random.uniform(k3, (num_hidden, num_outputs), dtype, -bound2, bound2)
    b2 = jax.random.uniform(k4, (num_outputs,), dtype, -bound2, bound2)
    return w1, b1, w2, b2


if __name__ == "__main__":
    num_inputs, num_hidden, num_outputs = 32, 64, 8

    key = jax.random.PRNGKey(0)
    kx_small, kp, kx_big = jax.random.split(key, 3)
    w1, b1, w2, b2 = init_params(kp, num_inputs, num_hidden, num_outputs)

    # One-time param prep (padding hoisted out of the per-call wrapper).
    prepared = jax.block_until_ready(
        jax.tree_util.tree_map(jnp.asarray, prepare_params(w1, b1, w2, b2)[:4])
    ) + (num_outputs,)

    def ref_fwd(x):
        return jnp.tanh(x @ w1 + b1) @ w2 + b2

    # 1) Tiny batch -> gridless whole-array-in-VMEM path.
    x_small = jax.random.normal(kx_small, (8, num_inputs), jnp.float32)
    out_small = jax.block_until_ready(
        simple_classifier_forward(x_small, prepared))
    assert out_small.shape == (8, num_outputs)
    assert jnp.allclose(out_small, ref_fwd(x_small), atol=1e-5, rtol=1e-5)

    # 2) Medium batch -> still gridless (fits the VMEM budget; grid steps are
    #    pure overhead on single-TC chips).
    x_big = jax.random.normal(kx_big, (300, num_inputs), jnp.float32)
    out_big = jax.block_until_ready(
        simple_classifier_forward(x_big, prepared))
    assert out_big.shape == (300, num_outputs)
    assert jnp.allclose(out_big, ref_fwd(x_big), atol=1e-5, rtol=1e-5)

    # 3) Force the batch-tiled grid path (even grid, ragged last block, no
    #    batch padding) to verify it compiles and matches too.
    out_grid = jax.block_until_ready(
        simple_classifier_forward(x_big, prepared, tile_b=128,
                                  gridless_limit_bytes=0))
    assert out_grid.shape == (300, num_outputs)
    assert jnp.allclose(out_grid, ref_fwd(x_big), atol=1e-5, rtol=1e-5)

    print("KERNEL_OK")
</pallas_src>

<mosaic_0001>
module attributes {stable_mosaic.version = 11 : i64} {
  func.func @mlp_kernel(%arg0: memref<8x32xf32, #tpu.memory_space<vmem>>, %arg1: memref<32x128xf32, #tpu.memory_space<vmem>>, %arg2: memref<1x128xf32, #tpu.memory_space<vmem>>, %arg3: memref<128x128xf32, #tpu.memory_space<vmem>>, %arg4: memref<1x128xf32, #tpu.memory_space<vmem>>, %arg5: memref<8x128xf32, #tpu.memory_space<vmem>>) attributes {dimension_semantics = [], scalar_prefetch = 0 : i64, scratch_operands = 0 : i64, tpu.core_type = #tpu.core_type<tc>} {
    %c0 = arith.constant 0 : index
    %c0_0 = arith.constant 0 : index
    %0 = vector.load %arg0[%c0, %c0_0] : memref<8x32xf32, #tpu.memory_space<vmem>>, vector<8x32xf32>
    %c0_1 = arith.constant 0 : index
    %c0_2 = arith.constant 0 : index
    %1 = vector.load %arg1[%c0_1, %c0_2] : memref<32x128xf32, #tpu.memory_space<vmem>>, vector<32x128xf32>
    %cst = arith.constant dense<0.000000e+00> : vector<8x128xf32>
    %2 = tpu.matmul %0, %1, %cst {dimension_numbers = #tpu.dot_dimension_numbers<[1], [0], [0], [1], [0, 0, 1, 1], [], []>} : vector<8x32xf32>, vector<32x128xf32>, vector<8x128xf32> -> vector<8x128xf32>
    %c0_3 = arith.constant 0 : index
    %c0_4 = arith.constant 0 : index
    %3 = vector.load %arg2[%c0_3, %c0_4] : memref<1x128xf32, #tpu.memory_space<vmem>>, vector<1x128xf32>
    %4 = vector.broadcast %3 : vector<1x128xf32> to vector<8x128xf32>
    %5 = arith.addf %2, %4 : vector<8x128xf32>
    %6 = math.tanh %5 : vector<8x128xf32>
    %c0_5 = arith.constant 0 : index
    %c0_6 = arith.constant 0 : index
    %7 = vector.load %arg3[%c0_5, %c0_6] : memref<128x128xf32, #tpu.memory_space<vmem>>, vector<128x128xf32>
    %cst_7 = arith.constant dense<0.000000e+00> : vector<8x128xf32>
    %8 = tpu.matmul %6, %7, %cst_7 {dimension_numbers = #tpu.dot_dimension_numbers<[1], [0], [0], [1], [0, 0, 1, 1], [], []>} : vector<8x128xf32>, vector<128x128xf32>, vector<8x128xf32> -> vector<8x128xf32>
    %c0_8 = arith.constant 0 : index
    %c0_9 = arith.constant 0 : index
    %9 = vector.load %arg4[%c0_8, %c0_9] : memref<1x128xf32, #tpu.memory_space<vmem>>, vector<1x128xf32>
    %10 = vector.broadcast %9 : vector<1x128xf32> to vector<8x128xf32>
    %11 = arith.addf %8, %10 : vector<8x128xf32>
    %c0_10 = arith.constant 0 : index
    %c0_11 = arith.constant 0 : index
    %12 = vector.load %arg5[%c0_10, %c0_11] : memref<8x128xf32, #tpu.memory_space<vmem>>, vector<8x128xf32>
    tpu.vector_store %arg5[%c0_10, %c0_11], %11 {strides = array<i32>} : memref<8x128xf32, #tpu.memory_space<vmem>>, vector<8x128xf32>,
    return
  }
}

</mosaic_0001>

<llo_original>
// kernel: tpu_custom_call.1
$region0: #{tpu_custom_call.1}
  #allocation0 [shape = 'u32[]', space=smem, size = 0x4, offset = 0x4, fixed_abs, tag = 'smem constant byte address 0x4 - core index']
  #allocation1 [shape = 'u32[144,128]{1,0:T(1,128)}', space=vmem, size = 0x12000, scoped, tag = 'internal scratch']
  %s0 = inlined_call_operand.hbm [shape: f32[8,32], index: 0, kind: input, shape index: {}]
  %s1 = inlined_call_operand.hbm [shape: f32[32,128], index: 1, kind: input, shape index: {}]
  %s2 = inlined_call_operand.vmem [shape: f32[1,128], index: 2, kind: input, shape index: {}]
  %s3 = inlined_call_operand.hbm [shape: f32[128,128], index: 3, kind: input, shape index: {}]
  %s4 = inlined_call_operand.vmem [shape: f32[1,128], index: 4, kind: input, shape index: {}]
  %s5 = inlined_call_operand.hbm [shape: f32[8,128], index: 5, kind: output, shape index: {}]
  %s6 = sld [smem:[#allocation0]]
  $region42: #{tpu_custom_call.1} parent=0
    _
  %s8 = ssub.s32 1, %s6
  %s9 = scalar_select 0, %s8, %s6
  $region1: #{tpu_custom_call.1} parent=0
    #allocation2 [shape = 'u8[4096]{0}', space=vmem, size = 0x1000, scoped, tag = 'input window, operand 0, single buffered']
    #allocation3 [shape = 's32[1]{0}', space=sflag, size = 0x4, scoped, tag = 'scoped memory for tpu_custom_call.1']
    #allocation4 [shape = 's32[1]{0}', space=sflag, size = 0x4, scoped, tag = 'scoped memory for tpu_custom_call.1']
    #allocation5 [shape = 'u8[16384]{0}', space=vmem, size = 0x4000, scoped, tag = 'input window, operand 1, single buffered']
    #allocation6 [shape = 's32[1]{0}', space=sflag, size = 0x4, scoped, tag = 'scoped memory for tpu_custom_call.1']
    #allocation7 [shape = 'u8[65536]{0}', space=vmem, size = 0x10000, scoped, tag = 'input window, operand 3, single buffered']
    #allocation8 [shape = 'u8[4096]{0}', space=vmem, size = 0x1000, scoped, tag = 'output window, operand 0, single buffered']
    %10 = vsyncpa [#allocation3], 0
    %11 = vsyncpa [#allocation6], 0
    %12 = vsyncpa [#allocation4], 0
    // Predicated region
    $region2: #{tpu_custom_call.1} parent=1 // pred_check
      _
    $region3: #{tpu_custom_call.1} parent=1 // pred_check_branch
      %14 = sbr.rel (0) target = $region5
    $region4: #{tpu_custom_call.1} parent=1 // pred_region
      %s16 = ssub.s32 128, 128
      %17 = vsyncadd [#allocation3], %s16
      %s19 = sshll.u32 [#allocation2], 4
      %s20 = int_to_ptr.vmem [resolvable:$true] %s19
      %22 = dma.hbm_to_vmem [thread:$0]  %s0, 128, %s20, [#allocation3]
    $region5: #{tpu_custom_call.1} parent=1 // pred_fallthru
      _
    // Predicated region
    $region6: #{tpu_custom_call.1} parent=1 // pred_check
      _
    $region7: #{tpu_custom_call.1} parent=1 // pred_check_branch
      %24 = sbr.rel (0) target = $region9
    $region8: #{tpu_custom_call.1} parent=1 // pred_region
      %s26 = ssub.s32 512, 512
      %27 = vsyncadd [#allocation6], %s26
      %s28 = sshll.u32 [#allocation5], 4
      %s29 = int_to_ptr.vmem [resolvable:$true] %s28
      %34 = dma.hbm_to_vmem [thread:$0]  %s1, 512, %s29, [#allocation6], 128, 128, 8
    $region9: #{tpu_custom_call.1} parent=1 // pred_fallthru
      _
    // Predicated region
    $region10: #{tpu_custom_call.1} parent=1 // pred_check
      _
    $region11: #{tpu_custom_call.1} parent=1 // pred_check_branch
      %36 = sbr.rel (0) target = $region13
    $region12: #{tpu_custom_call.1} parent=1 // pred_region
      _
    $region13: #{tpu_custom_call.1} parent=1 // pred_fallthru
      _
    // Predicated region
    $region14: #{tpu_custom_call.1} parent=1 // pred_check
      _
    $region15: #{tpu_custom_call.1} parent=1 // pred_check_branch
      %38 = sbr.rel (0) target = $region17
    $region16: #{tpu_custom_call.1} parent=1 // pred_region
      %s40 = ssub.s32 2048, 2048
      %41 = vsyncadd [#allocation6], %s40
      %s42 = sshll.u32 [#allocation7], 4
      %s43 = int_to_ptr.vmem [resolvable:$true] %s42
      %48 = dma.hbm_to_vmem [thread:$0]  %s3, 2048, %s43, [#allocation6], 128, 128, 8
    $region17: #{tpu_custom_call.1} parent=1 // pred_fallthru
      _
    // Predicated region
    $region18: #{tpu_custom_call.1} parent=1 // pred_check
      _
    $region19: #{tpu_custom_call.1} parent=1 // pred_check_branch
      %50 = sbr.rel (0) target = $region21
    $region20: #{tpu_custom_call.1} parent=1 // pred_region
      _
    $region21: #{tpu_custom_call.1} parent=1 // pred_fallthru
      _
    // Predicated region
    $region22: #{tpu_custom_call.1} parent=1 // pred_check
      _
    $region23: #{tpu_custom_call.1} parent=1 // pred_check_branch
      %52 = sbr.rel (0) target = $region25
    $region24: #{tpu_custom_call.1} parent=1 // pred_region
      %53 = dma.done [#allocation3], 128
    $region25: #{tpu_custom_call.1} parent=1 // pred_fallthru
      _
    // Predicated region
    $region26: #{tpu_custom_call.1} parent=1 // pred_check
      _
    $region27: #{tpu_custom_call.1} parent=1 // pred_check_branch
      %55 = sbr.rel (0) target = $region29
    $region28: #{tpu_custom_call.1} parent=1 // pred_region
      %56 = dma.done [#allocation6], 512
    $region29: #{tpu_custom_call.1} parent=1 // pred_fallthru
      _
    // Predicated region
    $region30: #{tpu_custom_call.1} parent=1 // pred_check
      _
    $region31: #{tpu_custom_call.1} parent=1 // pred_check_branch
      %58 = sbr.rel (0) target = $region33
    $region32: #{tpu_custom_call.1} parent=1 // pred_region
      %59 = dma.done [#allocation6], 2048
    $region33: #{tpu_custom_call.1} parent=1 // pred_fallthru
      _
    %v60 = vld [vmem:[#allocation2] sm:$0xff]
    %v61 = vld [vmem:[#allocation5] sm:$0xff]
    %v62 = vld [vmem:[#allocation5 + $0x8] sm:$0xff]
    %v63 = vld [vmem:[#allocation5 + $0x10] sm:$0xff]
    %v64 = vld [vmem:[#allocation5 + $0x18] sm:$0xff]
    %v65 = vld [vmem:[%s2] sm:$0x1]
    %v67 = vlaneseq
    %v68 = vshrl.u32 %v67, 7
    %v69 = vsub.s32 0, %v68
    %v70 = vrot.slane %v65, %v69
    %vm72 = vcmask 261120
    %v74 = vsel %vm72, %v60, 0
    %76 = vmatprep.subr.mxu0 0.0
    %77 = vmatpush1.msra.mxu0 %v61
    %78 = vmatprep.subr.mxu0 0.0
    %79 = vmatpush1.msra.mxu0 %v62
    %80 = vmatprep.subr.mxu0 0.0
    %81 = vmatpush1.msra.mxu0 %v63
    %82 = vmatprep.subr.mxu0 0.0
    %83 = vmatpush1.msra.mxu0 %v64
    %84 = vmatprep.subr.mxu0 0.0
    %85 = vmatpush1.msra.mxu0 0.0
    %86 = vmatprep.subr.mxu0 0.0
    %87 = vmatpush1.msra.mxu0 0.0
    %88 = vmatprep.subr.mxu0 0.0
    %89 = vmatpush1.msra.mxu0 0.0
    %90 = vmatprep.subr.mxu0 0.0
    %91 = vmatpush1.msra.mxu0 0.0
    %92 = vmatprep.subr.mxu0 0.0
    %93 = vmatpush1.msra.mxu0 0.0
    %94 = vmatprep.subr.mxu0 0.0
    %95 = vmatpush1.msra.mxu0 0.0
    %96 = vmatprep.subr.mxu0 0.0
    %97 = vmatpush1.msra.mxu0 0.0
    %98 = vmatprep.subr.mxu0 0.0
    %99 = vmatpush1.msra.mxu0 0.0
    %100 = vmatprep.subr.mxu0 0.0
    %101 = vmatpush1.msra.mxu0 0.0
    %102 = vmatprep.subr.mxu0 0.0
    %103 = vmatpush1.msra.mxu0 0.0
    %104 = vmatprep.subr.mxu0 0.0
    %105 = vmatpush1.msra.mxu0 0.0
    %106 = vmatprep.subr.mxu0 0.0
    %107 = vmatpush1.msra.mxu0 0.0
    %108 = vmatprep.subr.mxu0 0.0
    %109 = vmatpush1.msra.mxu0 0.0
    %110 = vmatprep.subr.mxu0 0.0
    %111 = vmatpush1.msra.mxu0 0.0
    %112 = vmatprep.subr.mxu0 0.0
    %113 = vmatpush1.msra.mxu0 0.0
    %114 = vmatprep.subr.mxu0 0.0
    %115 = vmatpush1.msra.mxu0 0.0
    %116 = vmatprep.subr.mxu0 0.0
    %117 = vmatpush1.msra.mxu0 0.0
    %118 = vmatprep.subr.mxu0 0.0
    %119 = vmatpush1.msra.mxu0 0.0
    %120 = vmatprep.subr.mxu0 0.0
    %121 = vmatpush1.msra.mxu0 0.0
    %122 = vmatprep.subr.mxu0 0.0
    %123 = vmatpush1.msra.mxu0 0.0
    %124 = vmatprep.subr.mxu0 0.0
    %125 = vmatpush1.msra.mxu0 0.0
    %126 = vmatprep.subr.mxu0 0.0
    %127 = vmatpush1.msra.mxu0 0.0
    %128 = vmatprep.subr.mxu0 0.0
    %129 = vmatpush1.msra.mxu0 0.0
    %130 = vmatprep.subr.mxu0 0.0
    %131 = vmatpush1.msra.mxu0 0.0
    %132 = vmatprep.subr.mxu0 0.0
    %133 = vmatpush1.msra.mxu0 0.0
    %134 = vmatprep.subr.mxu0 0.0
    %135 = vmatpush1.msra.mxu0 0.0
    %136 = vmatprep.subr.mxu0 0.0
    %137 = vmatpush1.msra.mxu0 0.0
    %138 = vmatprep.subr.mxu0 0.0
    %139 = vmatpush1.msra.mxu0 0.0
    %140 = vmatprep.mubr.f32.mxu0 0.0
    %141 = vmatmul.mubr.f32.gmra.mrb[0].mxu0 %v74
    %v142 = vpop.f32.mrb[0].mxu0
    %v143 = vadd.f32 %v70, %v142
    %v144 = vpop.f32.mrb[0].mxu0
    %145 = vdwg.mxu0
    %v146 = vtanh.pop %v143
    %v147 = vld [vmem:[#allocation7] sm:$0xff]
    %v148 = vld [vmem:[#allocation7 + $0x8] sm:$0xff]
    %v149 = vld [vmem:[#allocation7 + $0x10] sm:$0xff]
    %v150 = vld [vmem:[#allocation7 + $0x18] sm:$0xff]
    %v151 = vld [vmem:[#allocation7 + $0x20] sm:$0xff]
    %v152 = vld [vmem:[#allocation7 + $0x28] sm:$0xff]
    %v153 = vld [vmem:[#allocation7 + $0x30] sm:$0xff]
    %v154 = vld [vmem:[#allocation7 + $0x38] sm:$0xff]
    %v155 = vld [vmem:[#allocation7 + $0x40] sm:$0xff]
    %v156 = vld [vmem:[#allocation7 + $0x48] sm:$0xff]
    %v157 = vld [vmem:[#allocation7 + $0x50] sm:$0xff]
    %v158 = vld [vmem:[#allocation7 + $0x58] sm:$0xff]
    %v159 = vld [vmem:[#allocation7 + $0x60] sm:$0xff]
    %v160 = vld [vmem:[#allocation7 + $0x68] sm:$0xff]
    %v161 = vld [vmem:[#allocation7 + $0x70] sm:$0xff]
    %v162 = vld [vmem:[#allocation7 + $0x78] sm:$0xff]
    %v163 = vld [vmem:[%s4] sm:$0x1]
    %v165 = vlaneseq
    %v166 = vshrl.u32 %v165, 7
    %v167 = vsub.s32 0, %v166
    %v168 = vrot.slane %v163, %v167
    %170 = vmatprep.subr.mxu0 0.0
    %171 = vmatpush1.msra.mxu0 %v147
    %172 = vmatprep.subr.mxu0 0.0
    %173 = vmatpush1.msra.mxu0 %v148
    %174 = vmatprep.subr.mxu0 0.0
    %175 = vmatpush1.msra.mxu0 %v149
    %176 = vmatprep.subr.mxu0 0.0
    %177 = vmatpush1.msra.mxu0 %v150
    %178 = vmatprep.subr.mxu0 0.0
    %179 = vmatpush1.msra.mxu0 %v151
    %180 = vmatprep.subr.mxu0 0.0
    %181 = vmatpush1.msra.mxu0 %v152
    %182 = vmatprep.subr.mxu0 0.0
    %183 = vmatpush1.msra.mxu0 %v153
    %184 = vmatprep.subr.mxu0 0.0
    %185 = vmatpush1.msra.mxu0 %v154
    %186 = vmatprep.subr.mxu0 0.0
    %187 = vmatpush1.msra.mxu0 %v155
    %188 = vmatprep.subr.mxu0 0.0
    %189 = vmatpush1.msra.mxu0 %v156
    %190 = vmatprep.subr.mxu0 0.0
    %191 = vmatpush1.msra.mxu0 %v157
    %192 = vmatprep.subr.mxu0 0.0
    %193 = vmatpush1.msra.mxu0 %v158
    %194 = vmatprep.subr.mxu0 0.0
    %195 = vmatpush1.msra.mxu0 %v159
    %196 = vmatprep.subr.mxu0 0.0
    %197 = vmatpush1.msra.mxu0 %v160
    %198 = vmatprep.subr.mxu0 0.0
    %199 = vmatpush1.msra.mxu0 %v161
    %200 = vmatprep.subr.mxu0 0.0
    %201 = vmatpush1.msra.mxu0 %v162
    %202 = vmatprep.subr.mxu0 0.0
    %203 = vmatpush1.msra.mxu0 0.0
    %204 = vmatprep.subr.mxu0 0.0
    %205 = vmatpush1.msra.mxu0 0.0
    %206 = vmatprep.subr.mxu0 0.0
    %207 = vmatpush1.msra.mxu0 0.0
    %208 = vmatprep.subr.mxu0 0.0
    %209 = vmatpush1.msra.mxu0 0.0
    %210 = vmatprep.subr.mxu0 0.0
    %211 = vmatpush1.msra.mxu0 0.0
    %212 = vmatprep.subr.mxu0 0.0
    %213 = vmatpush1.msra.mxu0 0.0
    %214 = vmatprep.subr.mxu0 0.0
    %215 = vmatpush1.msra.mxu0 0.0
    %216 = vmatprep.subr.mxu0 0.0
    %217 = vmatpush1.msra.mxu0 0.0
    %218 = vmatprep.subr.mxu0 0.0
    %219 = vmatpush1.msra.mxu0 0.0
    %220 = vmatprep.subr.mxu0 0.0
    %221 = vmatpush1.msra.mxu0 0.0
    %222 = vmatprep.subr.mxu0 0.0
    %223 = vmatpush1.msra.mxu0 0.0
    %224 = vmatprep.subr.mxu0 0.0
    %225 = vmatpush1.msra.mxu0 0.0
    %226 = vmatprep.subr.mxu0 0.0
    %227 = vmatpush1.msra.mxu0 0.0
    %228 = vmatprep.subr.mxu0 0.0
    %229 = vmatpush1.msra.mxu0 0.0
    %230 = vmatprep.subr.mxu0 0.0
    %231 = vmatpush1.msra.mxu0 0.0
    %232 = vmatprep.subr.mxu0 0.0
    %233 = vmatpush1.msra.mxu0 0.0
    %234 = vmatprep.mubr.f32.mxu0 0.0
    %235 = vmatmul.mubr.f32.gmra.mrb[0].mxu0 %v146
    %v236 = vpop.f32.mrb[0].mxu0
    %v237 = vadd.f32 %v168, %v236
    %v238 = vpop.f32.mrb[0].mxu0
    %239 = vdwg.mxu0
    %240 = vst [vmem:[#allocation8] sm:$0xff] %v237
    // Predicated region
    $region34: #{tpu_custom_call.1} parent=1 // pred_check
      _
    $region35: #{tpu_custom_call.1} parent=1 // pred_check_branch
      %242 = sbr.rel (0) target = $region37
    $region36: #{tpu_custom_call.1} parent=1 // pred_region
      %s244 = ssub.s32 128, 128
      %245 = vsyncadd [#allocation4], %s244
      %s247 = sshll.u32 [#allocation8], 4
      %s248 = int_to_ptr.vmem [resolvable:$true] %s247
      %250 = dma.vmem_to_hbm [thread:$0]  %s248, 128, %s5, [#allocation4]
    $region37: #{tpu_custom_call.1} parent=1 // pred_fallthru
      _
    // Predicated region
    $region38: #{tpu_custom_call.1} parent=1 // pred_check
      _
    $region39: #{tpu_custom_call.1} parent=1 // pred_check_branch
      %252 = sbr.rel (0) target = $region41
    $region40: #{tpu_custom_call.1} parent=1 // pred_region
      %253 = dma.done [#allocation4], 128
    $region41: #{tpu_custom_call.1} parent=1 // pred_fallthru
      _
    %254 = vsyncpa [#allocation3], 1
    %255 = vsyncpa [#allocation6], 1
    %256 = vsyncpa [#allocation4], 1

</llo_original>
